<compile_context>
chip_gen: v5e
topology: v5e:2x2
jax: 0.10.0
libtpu: 0.0.40
codegen_flags: <defaults>
</compile_context>

<pallas_src>
import math

import numpy as np
import jax
import jax.numpy as jnp
from jax.experimental import pallas as pl
from jax.experimental.pallas import tpu as pltpu

_HALF_PI = math.pi / 2.0


def _make_kernel(num_frequencies: int, input_dim: int, include_input: bool,
                 use_mxu_scale: bool):
    fd = num_frequencies * input_dim
    fd2 = 2 * fd
    base = input_dim if include_input else 0

    def kernel(x_ref, scale_ref, phase_ref, window_ref, out_ref):
        # x_ref:      (D, TILE_N)  f32   points lane-dense
        # scale_ref:  (2FD, D) f32 (MXU path)  or  (2FD, 1) f32 (VPU path)
        # phase_ref:  (2FD, 1) f32   0 for sin rows, pi/2 for cos rows
        # window_ref: (2FD, 1) f32   cosine-easing window per (half, freq, dim) row
        # out_ref:    (base + 2FD, TILE_N)
        x = x_ref[...]
        if include_input:
            # NOTE: with out_dtype=bfloat16 this passthrough is also truncated.
            out_ref[0:input_dim, :] = x.astype(out_ref.dtype)

        if use_mxu_scale:
            # Replication + 2**f scaling as one tiny matmul on the idle MXU.
            # precision=HIGHEST keeps the power-of-two scaling exact (single nonzero
            # per row of the scale matrix).
            xb = jax.lax.dot_general(
                scale_ref[...], x, (((1,), (0,)), ((), ())),
                precision=jax.lax.Precision.HIGHEST,
                preferred_element_type=jnp.float32)                      # (2FD, TILE_N)
        else:
            # Sublane replication: row h*FD + f*D + d  <-  x[d].
            x_rep = jnp.concatenate([x] * (2 * num_frequencies), axis=0)  # (2FD, TILE_N)
            xb = x_rep * scale_ref[...]                                   # lane-broadcast

        # Single stacked sin over [xb ; xb + pi/2], single window multiply,
        # single aligned 2FD-row store (no separate sin/cos blocks).
        args = xb + phase_ref[...]
        out_ref[base:base + fd2, :] = (
            jnp.sin(args) * window_ref[...]).astype(out_ref.dtype)

    return kernel


def _choose_tile_n(n_pad: int, max_tile_n: int) -> int:
    candidates = [t for t in (16384, 8192, 4096, 2048, 1024, 512, 256, 128)
                  if t <= max_tile_n]
    # 1) largest tile giving an EVEN number of grid steps >= 2 (even split across
    #    v7x's two TensorCores; >= 2 steps keeps the DMA pipeline busy),
    # 2) else largest tile giving >= 2 steps,
    # 3) else largest tile that divides n_pad (single step).
    for t in candidates:
        if n_pad % t == 0 and (n_pad // t) >= 2 and (n_pad // t) % 2 == 0:
            return t
    for t in candidates:
        if n_pad % t == 0 and (n_pad // t) >= 2:
            return t
    for t in candidates:
        if n_pad % t == 0:
            return t
    return 128


def annealed_fourier_embedding(x, alpha, num_frequencies, include_input=True,
                               out_dtype=jnp.float32,
                               channels_last_output=True,
                               channels_first_input=False,
                               max_tile_n=8192,
                               use_mxu_scale=False):
    """Pallas equivalent of AnnealedFourierEmbedding.forward(x, alpha).

    x: (..., input_dim) array (or (input_dim, N) if channels_first_input=True).
    alpha: scalar (python float or 0-d array).

    Performance knobs:
      * out_dtype=jnp.bfloat16 halves HBM write traffic (kernel is write-bound on
        v5e/v6e) but also truncates the include_input passthrough rows.
      * channels_last_output=False returns the lane-dense (out_dim, N) slab directly,
        skipping the post-kernel transpose (the single biggest HBM lever); downstream
        matmuls should consume it as dot(W, out_t).
      * channels_first_input=True skips the input-side transpose when x is already (D, N).
    """
    assert num_frequencies >= 1, "num_frequencies must be >= 1"

    if channels_first_input:
        input_dim = int(x.shape[0])
        n = int(x.shape[1])
        batch_shape = (n,)
        x_t = x.astype(jnp.float32)                                   # (D, N)
    else:
        input_dim = int(x.shape[-1])
        batch_shape = x.shape[:-1]
        n = int(np.prod(batch_shape)) if batch_shape else 1
        x_t = jnp.transpose(x.reshape(n, input_dim).astype(jnp.float32))  # (D, N)

    fd = num_frequencies * input_dim
    fd2 = 2 * fd
    base = input_dim if include_input else 0
    out_dim = base + fd2

    # Pad N to a lane multiple only when needed (avoids the tail slice otherwise).
    n_pad = ((n + 127) // 128) * 128
    if n_pad != n:
        x_t = jnp.pad(x_t, ((0, 0), (0, n_pad - n)))

    tile_n = _choose_tile_n(n_pad, max_tile_n)
    grid = (n_pad // tile_n,)

    # Static per-row constants (computed once per call, never per tile).
    freqs = np.arange(num_frequencies, dtype=np.float32)
    scales_row = np.repeat((2.0 ** freqs).astype(np.float32), input_dim)  # (FD,)
    if use_mxu_scale:
        s = np.zeros((fd2, input_dim), dtype=np.float32)
        rows = np.arange(fd2)
        s[rows, rows % input_dim] = np.tile(scales_row, 2)
        scale_arg = jnp.asarray(s)                                      # (2FD, D)
        scale_spec = pl.BlockSpec((fd2, input_dim), lambda i: (0, 0))
    else:
        scale_arg = jnp.asarray(np.tile(scales_row, 2).reshape(fd2, 1))  # (2FD, 1)
        scale_spec = pl.BlockSpec((fd2, 1), lambda i: (0, 0))

    phase_col = jnp.asarray(
        np.concatenate([np.zeros(fd, np.float32),
                        np.full(fd, _HALF_PI, np.float32)]).reshape(fd2, 1))

    # Alpha-dependent cosine-easing window, expanded to one value per row.
    a = jnp.asarray(alpha, dtype=jnp.float32)
    w = jnp.clip(a - jnp.asarray(freqs), 0.0, 1.0)
    window = 0.5 * (1.0 + jnp.cos(math.pi * w + math.pi))               # (F,)
    window_col = jnp.tile(jnp.repeat(window, input_dim), 2).reshape(fd2, 1)

    out_itemsize = np.dtype(out_dtype).itemsize
    cost = pl.CostEstimate(
        flops=int(6 * fd * n_pad),
        transcendentals=int(2 * fd * n_pad),
        bytes_accessed=int(4 * input_dim * n_pad + out_itemsize * out_dim * n_pad
                           + 4 * 4 * fd2),
    )

    # Explicit VMEM budget: double-buffered in/out tiles (sublane-padded) + headroom.
    # Keeps large tiles safe under v5e's 16 MiB scoped default; capped below v7x's
    # 64 MiB physical VMEM.
    in_rows = -(-input_dim // 8) * 8
    out_rows = -(-out_dim // 8) * 8
    est = 2 * in_rows * tile_n * 4 + 2 * out_rows * tile_n * out_itemsize + (1 << 20)
    vmem_limit = int(min(max(3 * est // 2, 16 << 20), 56 << 20))

    out_t = pl.pallas_call(
        _make_kernel(num_frequencies, input_dim, include_input, use_mxu_scale),
        out_shape=jax.ShapeDtypeStruct((out_dim, n_pad), out_dtype),
        grid=grid,
        in_specs=[
            pl.BlockSpec((input_dim, tile_n), lambda i: (0, i)),   # x, channels-first
            scale_spec,                                            # 2**f per row
            pl.BlockSpec((fd2, 1), lambda i: (0, 0)),              # phase per row
            pl.BlockSpec((fd2, 1), lambda i: (0, 0)),              # window per row
        ],
        out_specs=pl.BlockSpec((out_dim, tile_n), lambda i: (0, i)),
        compiler_params=pltpu.CompilerParams(
            dimension_semantics=("parallel",),
            vmem_limit_bytes=vmem_limit),
        cost_estimate=cost,
    )(x_t, scale_arg, phase_col, window_col)

    out_t = out_t if n_pad == n else out_t[:, :n]
    if not channels_last_output:
        # Lane-dense channels-first slab: cheapest layout for a Pallas/MLP consumer.
        return out_t
    # Channels-last (module semantics).  The transposed copy is emitted directly in
    # out_dtype, so a bf16 consumer pays half the HBM traffic here too.
    return jnp.transpose(out_t).reshape(*batch_shape, out_dim)


def _reference(x, alpha, num_frequencies, include_input=True):
    """Pure-JAX port of the PyTorch forward for verification."""
    d = x.shape[-1]
    f = num_frequencies
    scales = 2.0 ** jnp.arange(f, dtype=jnp.float32)
    xb = (x[..., None, :] * scales[:, None]).reshape(*x.shape[:-1], -1)
    four = jnp.sin(jnp.concatenate([xb, xb + math.pi / 2.0], axis=-1))
    embed = four.reshape(-1, 2, f, d)
    w = jnp.clip(alpha - jnp.arange(f, dtype=jnp.float32), 0.0, 1.0)
    window = (0.5 * (1.0 + jnp.cos(math.pi * w + math.pi))).reshape(1, 1, -1, 1)
    embed = (window * embed).reshape(four.shape)
    if include_input:
        embed = jnp.concatenate([x, embed], axis=-1)
    return embed


def _check(x, alpha, num_frequencies, include_input):
    out = annealed_fourier_embedding(x, alpha, num_frequencies,
                                     include_input=include_input)
    out = jax.block_until_ready(out)
    ref = _reference(x, alpha, num_frequencies, include_input=include_input)
    d = x.shape[-1]
    expected_dim = (d if include_input else 0) + 2 * num_frequencies * d
    assert out.shape == (*x.shape[:-1], expected_dim), out.shape
    np.testing.assert_allclose(np.asarray(out), np.asarray(ref),
                               atol=5e-5, rtol=1e-5)
    return ref


if __name__ == "__main__":
    num_frequencies = 4
    input_dim = 3

    k0, k1, k2 = jax.random.split(jax.random.PRNGKey(0), 3)

    # 1) Lane-aligned NeRF-style point batch: (2, 128, 3) -> 256 points, no padding.
    x1 = jax.random.normal(k0, (2, 128, input_dim), dtype=jnp.float32)
    alpha1 = num_frequencies * 500.0 / 800.0   # calculate_alpha(F, step=500, end_step=800)
    ref1 = _check(x1, alpha1, num_frequencies, include_input=True)

    # 2) Ragged point count (exercises padding + tail slice) and include_input=False.
    x2 = jax.random.normal(k1, (5, 37, input_dim), dtype=jnp.float32)
    _check(x2, 1.3, num_frequencies, include_input=False)

    # 3) Larger batch (multi-step grid, big-tile chooser): 4096 points.
    x3 = jax.random.normal(k2, (4, 1024, input_dim), dtype=jnp.float32)
    _check(x3, float(num_frequencies), num_frequencies, include_input=True)

    # 4) Channels-first fast path (no post-kernel transpose; recommended for consumers).
    out_cf = annealed_fourier_embedding(x1, alpha1, num_frequencies,
                                        include_input=True,
                                        channels_last_output=False)
    out_cf = jax.block_until_ready(out_cf)
    np.testing.assert_allclose(
        np.asarray(out_cf),
        np.asarray(ref1).reshape(-1, out_cf.shape[0]).T,
        atol=5e-5, rtol=1e-5)

    # 5) bf16 output (recommended HBM-write saver when the consumer tolerates it).
    out_bf = annealed_fourier_embedding(x1, alpha1, num_frequencies,
                                        include_input=True,
                                        out_dtype=jnp.bfloat16)
    out_bf = jax.block_until_ready(out_bf)
    np.testing.assert_allclose(np.asarray(out_bf, dtype=np.float32),
                               np.asarray(ref1), atol=5e-2, rtol=5e-2)

    print("KERNEL_OK")
</pallas_src>

<mosaic_0001>
module attributes {stable_mosaic.version = 11 : i64} {
  func.func @kernel(%arg0: i32, %arg1: memref<3x128xf32, #tpu.memory_space<vmem>>, %arg2: memref<24x1xf32, #tpu.memory_space<vmem>>, %arg3: memref<24x1xf32, #tpu.memory_space<vmem>>, %arg4: memref<24x1xf32, #tpu.memory_space<vmem>>, %arg5: memref<27x128xf32, #tpu.memory_space<vmem>>) attributes {dimension_semantics = [#tpu.dimension_semantics<parallel>], iteration_bounds = array<i64: 2>, scalar_prefetch = 0 : i64, scratch_operands = 0 : i64, tpu.core_type = #tpu.core_type<tc>, window_params = [{transform_indices = @transform_0, window_bounds = array<i64: 3, 128>}, {pipeline_mode = #tpu.pipeline_mode<synchronous>, transform_indices = @transform_1, window_bounds = array<i64: 24, 1>}, {pipeline_mode = #tpu.pipeline_mode<synchronous>, transform_indices = @transform_2, window_bounds = array<i64: 24, 1>}, {pipeline_mode = #tpu.pipeline_mode<synchronous>, transform_indices = @transform_3, window_bounds = array<i64: 24, 1>}, {transform_indices = @transform_4, window_bounds = array<i64: 27, 128>}]} {
    %c0 = arith.constant 0 : index
    %c0_0 = arith.constant 0 : index
    %0 = vector.load %arg1[%c0, %c0_0] : memref<3x128xf32, #tpu.memory_space<vmem>>, vector<3x128xf32>
    %c0_1 = arith.constant 0 : index
    %c0_2 = arith.constant 0 : index
    %1 = vector.load %arg5[%c0_1, %c0_2] : memref<27x128xf32, #tpu.memory_space<vmem>>, vector<3x128xf32>
    tpu.vector_store %arg5[%c0_1, %c0_2], %0 {strides = array<i32>} : memref<27x128xf32, #tpu.memory_space<vmem>>, vector<3x128xf32>,
    %2 = tpu.concatenate %0, %0, %0, %0, %0, %0, %0, %0 in 0 : vector<3x128xf32>, vector<3x128xf32>, vector<3x128xf32>, vector<3x128xf32>, vector<3x128xf32>, vector<3x128xf32>, vector<3x128xf32>, vector<3x128xf32> -> vector<24x128xf32>
    %c0_3 = arith.constant 0 : index
    %c0_4 = arith.constant 0 : index
    %3 = vector.load %arg2[%c0_3, %c0_4] : memref<24x1xf32, #tpu.memory_space<vmem>>, vector<24x1xf32>
    %4 = vector.broadcast %3 : vector<24x1xf32> to vector<24x128xf32>
    %5 = arith.mulf %2, %4 : vector<24x128xf32>
    %c0_5 = arith.constant 0 : index
    %c0_6 = arith.constant 0 : index
    %6 = vector.load %arg3[%c0_5, %c0_6] : memref<24x1xf32, #tpu.memory_space<vmem>>, vector<24x1xf32>
    %7 = vector.broadcast %6 : vector<24x1xf32> to vector<24x128xf32>
    %8 = arith.addf %5, %7 : vector<24x128xf32>
    %9 = math.sin %8 : vector<24x128xf32>
    %c0_7 = arith.constant 0 : index
    %c0_8 = arith.constant 0 : index
    %10 = vector.load %arg4[%c0_7, %c0_8] : memref<24x1xf32, #tpu.memory_space<vmem>>, vector<24x1xf32>
    %11 = vector.broadcast %10 : vector<24x1xf32> to vector<24x128xf32>
    %12 = arith.mulf %9, %11 : vector<24x128xf32>
    %c3 = arith.constant 3 : index
    %c0_9 = arith.constant 0 : index
    %13 = vector.load %arg5[%c3, %c0_9] : memref<27x128xf32, #tpu.memory_space<vmem>>, vector<24x128xf32>
    tpu.vector_store %arg5[%c3, %c0_9], %12 {strides = array<i32>} : memref<27x128xf32, #tpu.memory_space<vmem>>, vector<24x128xf32>,
    return
  }
  func.func @transform_0(%arg0: i32) -> (i32, i32) {
    %c0_i32 = arith.constant 0 : i32
    %c0_i32_0 = arith.constant 0 : i32
    return %c0_i32, %arg0 : i32, i32
  }
  func.func @transform_1(%arg0: i32) -> (i32, i32) {
    %c0_i32 = arith.constant 0 : i32
    %c0_i32_0 = arith.constant 0 : i32
    %c0_i32_1 = arith.constant 0 : i32
    return %c0_i32, %c0_i32_0 : i32, i32
  }
  func.func @transform_2(%arg0: i32) -> (i32, i32) {
    %c0_i32 = arith.constant 0 : i32
    %c0_i32_0 = arith.constant 0 : i32
    %c0_i32_1 = arith.constant 0 : i32
    return %c0_i32, %c0_i32_0 : i32, i32
  }
  func.func @transform_3(%arg0: i32) -> (i32, i32) {
    %c0_i32 = arith.constant 0 : i32
    %c0_i32_0 = arith.constant 0 : i32
    %c0_i32_1 = arith.constant 0 : i32
    return %c0_i32, %c0_i32_0 : i32, i32
  }
  func.func @transform_4(%arg0: i32) -> (i32, i32) {
    %c0_i32 = arith.constant 0 : i32
    %c0_i32_0 = arith.constant 0 : i32
    return %c0_i32, %arg0 : i32, i32
  }
}

</mosaic_0001>

<llo_original>
// kernel: tpu_custom_call.1
$region0: #{tpu_custom_call.1}
  #allocation0 [shape = 'u32[]', space=smem, size = 0x4, offset = 0x4, fixed_abs, tag = 'smem constant byte address 0x4 - core index']
  #allocation1 [shape = 'u32[72,128]{1,0:T(1,128)}', space=vmem, size = 0x9000, scoped, tag = 'internal scratch']
  %s0 = inlined_call_operand.vmem [shape: f32[3,256], index: 0, kind: input, shape index: {}]
  %s1 = inlined_call_operand.vmem [shape: f32[24,1], index: 1, kind: input, shape index: {}]
  %s2 = inlined_call_operand.vmem [shape: f32[24,1], index: 2, kind: input, shape index: {}]
  %s3 = inlined_call_operand.vmem [shape: f32[24,1], index: 3, kind: input, shape index: {}]
  %s4 = inlined_call_operand.hbm [shape: f32[27,256], index: 4, kind: output, shape index: {}]
  %s5 = sld [smem:[#allocation0]]
  $region49: #{tpu_custom_call.1} parent=0
    _
  %s7 = ssub.s32 1, %s5
  %s8 = scalar_select 0, %s7, %s5
  $region1: #{tpu_custom_call.1} parent=0
    #allocation2 [shape = 'u8[32768]{0}', space=vmem, size = 0x8000, scoped, tag = 'output window, operand 0']
    #allocation3 [shape = 's32[2]{0}', space=sflag, size = 0x8, scoped, tag = 'scoped memory for tpu_custom_call.1']
    %9 = vsyncpa [#allocation3], 0
    %s10 = scalar_lea.sflag [#allocation3], 1
    %11 = vsyncpa %s10, 0
    loop: start=0, step=1, limit=4
    $region2: #{tpu_custom_call.1} parent=1 // loop_pre_header
      _
    $region3: #{tpu_custom_call.1} parent=1 // loop_header
      %s13 = sphi 0, %s17
      %p14 = scmp.ge.s32.totalorder %s13, 4
      %s23 = sphi 0, %s25
      %s26 = sphi 0, %s23
      %s27 = sphi 0, %s26
      %s43 = sphi 0, %s27
      %s47 = sphi 0, %s47
      %s49 = sphi 0, %s47
      %s50 = sphi 0, %s49
      %s64 = sphi 0, %s50
      %s68 = sphi 0, %s68
      %s70 = sphi 0, %s68
      %s71 = sphi 0, %s70
      %s85 = sphi 0, %s71
      %s89 = sphi 0, %s89
      %s91 = sphi 0, %s89
      %s92 = sphi 0, %s91
      %s106 = sphi 0, %s92
      %s112 = sphi 0, %s114
      %s115 = sphi 0, %s112
      %s116 = sphi 0, %s115
      %s132 = sphi 0, %s116
    $region4: #{tpu_custom_call.1} parent=1 // loop_header_branch
      %16 = sbr.rel (%p14) target = $region8
    $region5: #{tpu_custom_call.1} parent=1 // loop_body
      %s18 = ssub.s32 %s13, 1
      %s19 = ssub.s32 %s13, 2
      %s20 = sadd.s32 %s13, 1
      %s21 = ssub.s32 %s13, %s20
      %p22 = scmp.eq.s32.totalorder %s21, 0
      %s24 = sadd.s32 %s23, 1
      %s25 = scalar_select %p22, %s23, %s24
      %p28 = pneg %p22
      %p29 = scmp.eq.s32.totalorder %s13, 1
      %p30 = por %p28, %p29
      %p31 = scmp.ne.s32.totalorder %s23, %s26
      %p32 = scmp.eq.s32.totalorder %s13, 0
      %p33 = por %p31, %p32
      %p34 = scmp.ne.s32.totalorder %s23, %s26
      %p35 = scmp.eq.s32.totalorder %s18, 1
      %p36 = por %p34, %p35
      %p37 = scmp.ne.s32.totalorder %s26, %s27
      %p38 = scmp.eq.s32.totalorder %s18, 0
      %p39 = por %p37, %p38
      %p40 = scmp.ne.s32.totalorder %s26, %s27
      %p41 = scmp.eq.s32.totalorder %s19, 1
      %p42 = por %p40, %p41
      %p44 = scmp.ne.s32.totalorder %s27, %s43
      %p45 = scmp.eq.s32.totalorder %s19, 0
      %p46 = por %p44, %p45
      %s48 = sadd.s32 %s47, 1
      %p51 = scmp.eq.s32.totalorder %s13, 1
      %p52 = scmp.ne.s32.totalorder %s47, %s49
      %p53 = scmp.eq.s32.totalorder %s13, 0
      %p54 = por %p52, %p53
      %p55 = scmp.ne.s32.totalorder %s47, %s49
      %p56 = scmp.eq.s32.totalorder %s18, 1
      %p57 = por %p55, %p56
      %p58 = scmp.ne.s32.totalorder %s49, %s50
      %p59 = scmp.eq.s32.totalorder %s18, 0
      %p60 = por %p58, %p59
      %p61 = scmp.ne.s32.totalorder %s49, %s50
      %p62 = scmp.eq.s32.totalorder %s19, 1
      %p63 = por %p61, %p62
      %p65 = scmp.ne.s32.totalorder %s50, %s64
      %p66 = scmp.eq.s32.totalorder %s19, 0
      %p67 = por %p65, %p66
      %s69 = sadd.s32 %s68, 1
      %p72 = scmp.eq.s32.totalorder %s13, 1
      %p73 = scmp.ne.s32.totalorder %s68, %s70
      %p74 = scmp.eq.s32.totalorder %s13, 0
      %p75 = por %p73, %p74
      %p76 = scmp.ne.s32.totalorder %s68, %s70
      %p77 = scmp.eq.s32.totalorder %s18, 1
      %p78 = por %p76, %p77
      %p79 = scmp.ne.s32.totalorder %s70, %s71
      %p80 = scmp.eq.s32.totalorder %s18, 0
      %p81 = por %p79, %p80
      %p82 = scmp.ne.s32.totalorder %s70, %s71
      %p83 = scmp.eq.s32.totalorder %s19, 1
      %p84 = por %p82, %p83
      %p86 = scmp.ne.s32.totalorder %s71, %s85
      %p87 = scmp.eq.s32.totalorder %s19, 0
      %p88 = por %p86, %p87
      %s90 = sadd.s32 %s89, 1
      %p93 = scmp.eq.s32.totalorder %s13, 1
      %p94 = scmp.ne.s32.totalorder %s89, %s91
      %p95 = scmp.eq.s32.totalorder %s13, 0
      %p96 = por %p94, %p95
      %p97 = scmp.ne.s32.totalorder %s89, %s91
      %p98 = scmp.eq.s32.totalorder %s18, 1
      %p99 = por %p97, %p98
      %p100 = scmp.ne.s32.totalorder %s91, %s92
      %p101 = scmp.eq.s32.totalorder %s18, 0
      %p102 = por %p100, %p101
      %p103 = scmp.ne.s32.totalorder %s91, %s92
      %p104 = scmp.eq.s32.totalorder %s19, 1
      %p105 = por %p103, %p104
      %p107 = scmp.ne.s32.totalorder %s92, %s106
      %p108 = scmp.eq.s32.totalorder %s19, 0
      %p109 = por %p107, %p108
      %s110 = ssub.s32 %s13, %s20
      %p111 = scmp.eq.s32.totalorder %s110, 0
      %s113 = sadd.s32 %s112, 1
      %s114 = scalar_select %p111, %s112, %s113
      %p117 = pneg %p111
      %p118 = scmp.eq.s32.totalorder %s13, 1
      %p119 = por %p117, %p118
      %p120 = scmp.ne.s32.totalorder %s112, %s115
      %p121 = scmp.eq.s32.totalorder %s13, 0
      %p122 = por %p120, %p121
      %p123 = scmp.ne.s32.totalorder %s112, %s115
      %p124 = scmp.eq.s32.totalorder %s18, 1
      %p125 = por %p123, %p124
      %p126 = scmp.ne.s32.totalorder %s115, %s116
      %p127 = scmp.eq.s32.totalorder %s18, 0
      %p128 = por %p126, %p127
      %p129 = scmp.ne.s32.totalorder %s115, %s116
      %p130 = scmp.eq.s32.totalorder %s19, 1
      %p131 = por %p129, %p130
      %p133 = scmp.ne.s32.totalorder %s116, %s132
      %p134 = scmp.eq.s32.totalorder %s19, 0
      %p135 = por %p133, %p134
      %p136 = scmp.le.s32.totalorder 1, %s13
      %p137 = scmp.lt.s32.totalorder %s13, 3
      %p138 = pnand %p136, %p137
      %p139 = pneg %p138
      // Predicated region
      $region9: #{tpu_custom_call.1} parent=5 // pred_check
        _
      $region10: #{tpu_custom_call.1} parent=5 // pred_check_branch
        %141 = sbr.rel (%p138) target = $region12
      $region11: #{tpu_custom_call.1} parent=5 // pred_region
        %s142 = ssub.s32 %s13, 1
        // Predicated region
        $region13: #{tpu_custom_call.1} parent=11 // pred_check
          %p143 = pneg %p60
        $region14: #{tpu_custom_call.1} parent=11 // pred_check_branch
          %145 = sbr.rel (%p143) target = $region16
        $region15: #{tpu_custom_call.1} parent=11 // pred_region
          _
        $region16: #{tpu_custom_call.1} parent=11 // pred_fallthru
          _
        // Predicated region
        $region17: #{tpu_custom_call.1} parent=11 // pred_check
          %p146 = pneg %p81
        $region18: #{tpu_custom_call.1} parent=11 // pred_check_branch
          %148 = sbr.rel (%p146) target = $region20
        $region19: #{tpu_custom_call.1} parent=11 // pred_region
          _
        $region20: #{tpu_custom_call.1} parent=11 // pred_fallthru
          _
        // Predicated region
        $region21: #{tpu_custom_call.1} parent=11 // pred_check
          %p149 = pneg %p102
        $region22: #{tpu_custom_call.1} parent=11 // pred_check_branch
          %151 = sbr.rel (%p149) target = $region24
        $region23: #{tpu_custom_call.1} parent=11 // pred_region
          _
        $region24: #{tpu_custom_call.1} parent=11 // pred_fallthru
          _
      $region12: #{tpu_custom_call.1} parent=5 // pred_fallthru
        _
      %p152 = scmp.lt.s32.totalorder %s13, 2
      // Predicated region
      $region25: #{tpu_custom_call.1} parent=5 // pred_check
        %p153 = pneg %p152
      $region26: #{tpu_custom_call.1} parent=5 // pred_check_branch
        %155 = sbr.rel (%p153) target = $region28
      $region27: #{tpu_custom_call.1} parent=5 // pred_region
        // Predicated region
        $region29: #{tpu_custom_call.1} parent=27 // pred_check
          %p156 = pneg %p33
        $region30: #{tpu_custom_call.1} parent=27 // pred_check_branch
          %158 = sbr.rel (%p156) target = $region32
        $region31: #{tpu_custom_call.1} parent=27 // pred_region
          %p159 = scmp.lt.s32.totalorder %s13, 1
          %s160 = scalar_select %p159, %s13, 1
          %s161 = smul.addr %s160, 4
          %s162 = scalar_lea.vmem %s0, %s161
        $region32: #{tpu_custom_call.1} parent=27 // pred_fallthru
          _
      $region28: #{tpu_custom_call.1} parent=5 // pred_fallthru
        _
      %p163 = scmp.le.s32.totalorder 1, %s13
      %p164 = scmp.lt.s32.totalorder %s13, 3
      %p165 = pnand %p163, %p164
      %p166 = pneg %p165
      // Predicated region
      $region33: #{tpu_custom_call.1} parent=5 // pred_check
        _
      $region34: #{tpu_custom_call.1} parent=5 // pred_check_branch
        %168 = sbr.rel (%p165) target = $region36
      $region35: #{tpu_custom_call.1} parent=5 // pred_region
        %s169 = ssub.s32 %s13, 1
        %p170 = scmp.lt.s32.totalorder %s18, 1
        %s171 = scalar_select %p170, %s18, 1
        %s172 = smul.addr %s171, 4
        %s173 = scalar_lea.vmem %s0, %s172
        %p174 = pneg %p39
        %p175 = pneg %p36
        %p176 = pneg %p60
        %p177 = pneg %p57
        %p178 = pneg %p81
        %p179 = pneg %p78
        %p180 = pneg %p102
        %p181 = pneg %p99
        %p182 = pneg %p128
        %p183 = pneg %p125
        %s184 = sand.u32 %s115, 1
        %s185 = scalar_lea.sflag [#allocation3], %s184
        %s186 = sand.u32 %s115, 1
        %s187 = smul.addr %s186, 32
        %s188 = scalar_lea.vmem [#allocation2], %s187
        %p189 = scmp.lt.s32.totalorder %s18, 1
        %s190 = scalar_select %p189, %s18, 1
        %s191 = smul.addr %s190, 4
        %s192 = scalar_lea.vmem %s0, %s191
        %v193 = vld [vmem:[%s192] sm:$0x7]
        %194 = vst [vmem:[%s188] sm:$0x7] %v193
        %v196 = vrot.slane %v193, 5
        %v198 = vrot.slane %v193, 2
        %v200 = vrot.slane %v193, 7
        %v202 = vrot.slane %v193, 4
        %v204 = vrot.slane %v193, 1
        %v206 = vrot.slane %v193, 6
        %v208 = vrot.slane %v193, 3
        %vm210 = vcmask 1042432
        %v211 = vsel %vm210, %v193, %v196
        %vm212 = vcmask 1045504
        %v213 = vsel %vm212, %v211, %v198
        %vm214 = vcmask 1040384
        %v215 = vsel %vm214, %v198, %v200
        %vm216 = vcmask 1043456
        %v217 = vsel %vm216, %v215, %v202
        %vm218 = vcmask 1046528
        %v219 = vsel %vm218, %v217, %v204
        %vm220 = vcmask 1041408
        %v221 = vsel %vm220, %v204, %v206
        %vm222 = vcmask 1044480
        %v223 = vsel %vm222, %v221, %v208
        %v224 = vld [vmem:[%s1] sm:$0xff]
        %v225 = vld [vmem:[%s1 + $0x8] sm:$0xff]
        %v226 = vld [vmem:[%s1 + $0x10] sm:$0xff]
        %228 = vset.pattern.permute.xlu0 0
        %229 = vperm.xlu0 %228, %v224
        %v230 = vpop.permute.xlu0 %229
        %233 = vset.pattern.permute.xlu0 0
        %234 = vperm.xlu0 %233, %v225
        %v235 = vpop.permute.xlu0 %234
        %238 = vset.pattern.permute.xlu0 0
        %239 = vperm.xlu0 %238, %v226
        %v240 = vpop.permute.xlu0 %239
        %v242 = vmul.f32 %v213, %v230
        %v243 = vmul.f32 %v219, %v235
        %v244 = vmul.f32 %v223, %v240
        %v245 = vld [vmem:[%s2] sm:$0xff]
        %v246 = vld [vmem:[%s2 + $0x8] sm:$0xff]
        %v247 = vld [vmem:[%s2 + $0x10] sm:$0xff]
        %249 = vset.pattern.permute.xlu0 0
        %250 = vperm.xlu0 %249, %v245
        %v251 = vpop.permute.xlu0 %250
        %254 = vset.pattern.permute.xlu0 0
        %255 = vperm.xlu0 %254, %v246
        %v256 = vpop.permute.xlu0 %255
        %259 = vset.pattern.permute.xlu0 0
        %260 = vperm.xlu0 %259, %v247
        %v261 = vpop.permute.xlu0 %260
        %v263 = vadd.f32 %v242, %v251
        %v264 = vadd.f32 %v243, %v256
        %v265 = vadd.f32 %v244, %v261
        %v266 = vand.u32 2147483647, %v263
        %vm267 = vcmp.le.f32.partialorder %v266, 0.7853982
        %vm268 = vcmp.lt.s32.totalorder %v263, 0
        %v269 = vand.u32 %v263, 2139095040
        %v270 = vshrl.u32 %v269, 23
        %v271 = vsub.s32 %v270, 127
        %v272 = vand.u32 2147483647, %v263
        %v273 = vand.u32 %v272, 8388607
        %v274 = vor.u32 %v273, 8388608
        %v275 = vsub.s32 0, %v274
        %v276 = vadd.s32 %v271, 1
        %vm277 = vcmp.gt.s32.totalorder %v276, 0
        %v278 = vsel %vm277, %v276, 0
        %v279 = vshrl.u32 %v278, 5
        %v280 = vand.u32 %v278, 31
        %v281 = vsub.s32 32, %v280
        %v282 = vshrl.u32 683565275, %v281
        %v283 = vshll.u32 683565275, %v280
        %v284 = vshrl.u32 2475754826, %v281
        %v285 = vor.u32 %v283, %v284
        %v286 = vshll.u32 2475754826, %v280
        %v287 = vshrl.u32 2131351028, %v281
        %v288 = vor.u32 %v286, %v287
        %v289 = vshll.u32 2131351028, %v280
        %v290 = vshrl.u32 2102212464, %v281
        %v291 = vor.u32 %v289, %v290
        %v292 = vshll.u32 2102212464, %v280
        %v293 = vshrl.u32 920167782, %v281
        %v294 = vor.u32 %v292, %v293
        %v295 = vshll.u32 920167782, %v280
        %v296 = vshrl.u32 1326507024, %v281
        %v297 = vor.u32 %v295, %v296
        %vm298 = vcmp.lt.s32.totalorder %v279, 1
        %vm299 = vcmp.lt.s32.totalorder %v279, 2
        %vm300 = vcmp.lt.s32.totalorder %v279, 3
        %vm301 = vcmp.lt.s32.totalorder %v279, 4
        %v302 = vsel %vm298, %v282, %v285
        %v303 = vsel %vm301, %v291, 2102212464
        %v304 = vsel %vm300, %v288, %v303
        %v305 = vsel %vm299, %v302, %v304
        %v306 = vsel %vm298, %v285, %v288
        %v307 = vsel %vm301, %v294, 920167782
        %v308 = vsel %vm300, %v291, %v307
        %v309 = vsel %vm299, %v306, %v308
        %v310 = vsel %vm298, %v288, %v291
        %v311 = vsel %vm301, %v297, 1326507024
        %v312 = vsel %vm300, %v294, %v311
        %v313 = vsel %vm299, %v310, %v312
        %v314 = vshll.u32 %v274, 8
        %v315 = vand.u32 %v314, 65535
        %v316 = vshrl.u32 %v314, 16
        %v317 = vand.u32 %v313, 65535
        %v318 = vshrl.u32 %v313, 16
        %v319 = vmul.u32 %v315, %v317
        %v320 = vmul.u32 %v315, %v318
        %v321 = vmul.u32 %v316, %v317
        %v322 = vmul.u32 %v316, %v318
        %v323 = vshll.u32 %v320, 16
        %v324 = vshrl.u32 %v320, 16
        %v325 = vshll.u32 %v321, 16
        %v326 = vshrl.u32 %v321, 16
        %vm327 = vc.u32 %v319, %v323
        %v328 = vsel %vm327, 1, 0
        %v329 = vadd.s32 %v319, %v323
        %v330 = vadd.s32 %v322, %v328
        %vm331 = vc.u32 %v329, %v325
        %v332 = vsel %vm331, 1, 0
        %v333 = vadd.s32 %v329, %v325
        %v334 = vadd.s32 %v330, %v332
        %v335 = vadd.s32 %v334, %v324
        %v336 = vadd.s32 %v335, %v326
        %v337 = vand.u32 %v314, 65535
        %v338 = vshrl.u32 %v314, 16
        %v339 = vand.u32 %v309, 65535
        %v340 = vshrl.u32 %v309, 16
        %v341 = vmul.u32 %v337, %v339
        %v342 = vmul.u32 %v337, %v340
        %v343 = vmul.u32 %v338, %v339
        %v344 = vmul.u32 %v338, %v340
        %v345 = vshll.u32 %v342, 16
        %v346 = vshrl.u32 %v342, 16
        %v347 = vshll.u32 %v343, 16
        %v348 = vshrl.u32 %v343, 16
        %vm349 = vc.u32 %v341, %v345
        %v350 = vsel %vm349, 1, 0
        %v351 = vadd.s32 %v341, %v345
        %v352 = vadd.s32 %v344, %v350
        %vm353 = vc.u32 %v351, %v347
        %v354 = vsel %vm353, 1, 0
        %v355 = vadd.s32 %v351, %v347
        %v356 = vadd.s32 %v352, %v354
        %v357 = vadd.s32 %v356, %v346
        %v358 = vadd.s32 %v357, %v348
        %v359 = vmul.u32 %v314, %v305
        %v360 = vadd.s32 %v336, %v355
        %vm361 = vc.u32 %v336, %v355
        %v362 = vadd.s32 %v358, 1
        %v363 = vsel %vm361, %v362, %v358
        %v364 = vadd.s32 %v359, %v363
        %v365 = vadd.s32 %v364, 536870912
        %v366 = vshrl.u32 %v365, 30
        %v367 = vshll.u32 %v366, 30
        %v368 = vsub.s32 %v364, %v367
        %vm369 = vcmp.lt.s32.totalorder %v368, 0
        %v370 = vsub.s32 0, %v368
        %v371 = vsel %vm369, %v370, %v368
        %v372 = vclz %v371
        %v373 = vsub.s32 %v372, 2
        %vm374 = vcmp.gt.s32.totalorder 0, %v373
        %v375 = vsel %vm374, 0, %v373
        %v376 = vsub.s32 32, %v375
        %v377 = vshll.u32 %v368, %v375
        %v378 = vshrl.u32 %v360, %v376
        %v379 = vor.u32 %v377, %v378
        %v380 = vsub.s32 4294967266, %v375
        %v381 = vadd.s32 %v380, 127
        %v382 = vshll.u32 %v381, 23
        %v383 = vor.u32 4788187, %v382
        %v384 = vand.u32 2147483647, %v383
        %v386 = vcvt.s32.f32 %v379
        %v387 = vmul.f32 %v386, %v384
        %v388 = vxor.u32 %v387, 2147483648
        %v389 = vsel %vm268, %v388, %v387
        %v390 = vsub.s32 4, %v366
        %v391 = vsel %vm268, %v390, %v366
        %v392 = vsel %vm267, %v263, %v389
        %v393 = vsel %vm267, 0, %v391
        %v394 = vmul.f32 %v392, %v392
        %v395 = vmul.f32 %v394, -0.001358992
        %v396 = vadd.f32 %v395, 0.041655596
        %v397 = vmul.f32 %v394, %v396
        %v398 = vadd.f32 %v397, -0.4999988
        %v399 = vmul.f32 %v394, %v398
        %v400 = vadd.f32 1.0, %v399
        %v401 = vmul.f32 %v392, %v392
        %v402 = vmul.f32 %v401, -0.00019511016
        %v403 = vadd.f32 %v402, 0.008332121
        %v404 = vmul.f32 %v401, %v403
        %v405 = vadd.f32 %v404, -0.16666654
        %v406 = vmul.f32 %v401, %v405
        %v407 = vadd.f32 %v406, 1.0
        %v408 = vmul.f32 %v407, %v392
        %vm409 = vweird.f32 %v263
        %v410 = vadd.s32 %v393, 3
        %v411 = vand.u32 %v410, 3
        %vm412 = vcmp.lt.s32.totalorder %v411, 2
        %vm413 = vcmp.eq.s32.totalorder %v411, 0
        %v414 = vxor.u32 %v408, 2147483648
        %v415 = vsel %vm413, %v400, %v414
        %vm416 = vcmp.eq.s32.totalorder %v411, 2
        %v417 = vxor.u32 %v400, 2147483648
        %v418 = vsel %vm416, %v417, %v408
        %v419 = vsel %vm412, %v415, %v418
        %v420 = vsel %vm409, nan, %v419
        %v421 = vand.u32 2147483647, %v264
        %vm422 = vcmp.le.f32.partialorder %v421, 0.7853982
        %vm423 = vcmp.lt.s32.totalorder %v264, 0
        %v424 = vand.u32 %v264, 2139095040
        %v425 = vshrl.u32 %v424, 23
        %v426 = vsub.s32 %v425, 127
        %v427 = vand.u32 2147483647, %v264
        %v428 = vand.u32 %v427, 8388607
        %v429 = vor.u32 %v428, 8388608
        %v430 = vsub.s32 0, %v429
        %v431 = vadd.s32 %v426, 1
        %vm432 = vcmp.gt.s32.totalorder %v431, 0
        %v433 = vsel %vm432, %v431, 0
        %v434 = vshrl.u32 %v433, 5
        %v435 = vand.u32 %v433, 31
        %v436 = vsub.s32 32, %v435
        %v437 = vshrl.u32 683565275, %v436
        %v438 = vshll.u32 683565275, %v435
        %v439 = vshrl.u32 2475754826, %v436
        %v440 = vor.u32 %v438, %v439
        %v441 = vshll.u32 2475754826, %v435
        %v442 = vshrl.u32 2131351028, %v436
        %v443 = vor.u32 %v441, %v442
        %v444 = vshll.u32 2131351028, %v435
        %v445 = vshrl.u32 2102212464, %v436
        %v446 = vor.u32 %v444, %v445
        %v447 = vshll.u32 2102212464, %v435
        %v448 = vshrl.u32 920167782, %v436
        %v449 = vor.u32 %v447, %v448
        %v450 = vshll.u32 920167782, %v435
        %v451 = vshrl.u32 1326507024, %v436
        %v452 = vor.u32 %v450, %v451
        %vm453 = vcmp.lt.s32.totalorder %v434, 1
        %vm454 = vcmp.lt.s32.totalorder %v434, 2
        %vm455 = vcmp.lt.s32.totalorder %v434, 3
        %vm456 = vcmp.lt.s32.totalorder %v434, 4
        %v457 = vsel %vm453, %v437, %v440
        %v458 = vsel %vm456, %v446, 2102212464
        %v459 = vsel %vm455, %v443, %v458
        %v460 = vsel %vm454, %v457, %v459
        %v461 = vsel %vm453, %v440, %v443
        %v462 = vsel %vm456, %v449, 920167782
        %v463 = vsel %vm455, %v446, %v462
        %v464 = vsel %vm454, %v461, %v463
        %v465 = vsel %vm453, %v443, %v446
        %v466 = vsel %vm456, %v452, 1326507024
        %v467 = vsel %vm455, %v449, %v466
        %v468 = vsel %vm454, %v465, %v467
        %v469 = vshll.u32 %v429, 8
        %v470 = vand.u32 %v469, 65535
        %v471 = vshrl.u32 %v469, 16
        %v472 = vand.u32 %v468, 65535
        %v473 = vshrl.u32 %v468, 16
        %v474 = vmul.u32 %v470, %v472
        %v475 = vmul.u32 %v470, %v473
        %v476 = vmul.u32 %v471, %v472
        %v477 = vmul.u32 %v471, %v473
        %v478 = vshll.u32 %v475, 16
        %v479 = vshrl.u32 %v475, 16
        %v480 = vshll.u32 %v476, 16
        %v481 = vshrl.u32 %v476, 16
        %vm482 = vc.u32 %v474, %v478
        %v483 = vsel %vm482, 1, 0
        %v484 = vadd.s32 %v474, %v478
        %v485 = vadd.s32 %v477, %v483
        %vm486 = vc.u32 %v484, %v480
        %v487 = vsel %vm486, 1, 0
        %v488 = vadd.s32 %v484, %v480
        %v489 = vadd.s32 %v485, %v487
        %v490 = vadd.s32 %v489, %v479
        %v491 = vadd.s32 %v490, %v481
        %v492 = vand.u32 %v469, 65535
        %v493 = vshrl.u32 %v469, 16
        %v494 = vand.u32 %v464, 65535
        %v495 = vshrl.u32 %v464, 16
        %v496 = vmul.u32 %v492, %v494
        %v497 = vmul.u32 %v492, %v495
        %v498 = vmul.u32 %v493, %v494
        %v499 = vmul.u32 %v493, %v495
        %v500 = vshll.u32 %v497, 16
        %v501 = vshrl.u32 %v497, 16
        %v502 = vshll.u32 %v498, 16
        %v503 = vshrl.u32 %v498, 16
        %vm504 = vc.u32 %v496, %v500
        %v505 = vsel %vm504, 1, 0
        %v506 = vadd.s32 %v496, %v500
        %v507 = vadd.s32 %v499, %v505
        %vm508 = vc.u32 %v506, %v502
        %v509 = vsel %vm508, 1, 0
        %v510 = vadd.s32 %v506, %v502
        %v511 = vadd.s32 %v507, %v509
        %v512 = vadd.s32 %v511, %v501
        %v513 = vadd.s32 %v512, %v503
        %v514 = vmul.u32 %v469, %v460
        %v515 = vadd.s32 %v491, %v510
        %vm516 = vc.u32 %v491, %v510
        %v517 = vadd.s32 %v513, 1
        %v518 = vsel %vm516, %v517, %v513
        %v519 = vadd.s32 %v514, %v518
        %v520 = vadd.s32 %v519, 536870912
        %v521 = vshrl.u32 %v520, 30
        %v522 = vshll.u32 %v521, 30
        %v523 = vsub.s32 %v519, %v522
        %vm524 = vcmp.lt.s32.totalorder %v523, 0
        %v525 = vsub.s32 0, %v523
        %v526 = vsel %vm524, %v525, %v523
        %v527 = vclz %v526
        %v528 = vsub.s32 %v527, 2
        %vm529 = vcmp.gt.s32.totalorder 0, %v528
        %v530 = vsel %vm529, 0, %v528
        %v531 = vsub.s32 32, %v530
        %v532 = vshll.u32 %v523, %v530
        %v533 = vshrl.u32 %v515, %v531
        %v534 = vor.u32 %v532, %v533
        %v535 = vsub.s32 4294967266, %v530
        %v536 = vadd.s32 %v535, 127
        %v537 = vshll.u32 %v536, 23
        %v538 = vor.u32 4788187, %v537
        %v539 = vand.u32 2147483647, %v538
        %v541 = vcvt.s32.f32 %v534
        %v542 = vmul.f32 %v541, %v539
        %v543 = vxor.u32 %v542, 2147483648
        %v544 = vsel %vm423, %v543, %v542
        %v545 = vsub.s32 4, %v521
        %v546 = vsel %vm423, %v545, %v521
        %v547 = vsel %vm422, %v264, %v544
        %v548 = vsel %vm422, 0, %v546
        %v549 = vmul.f32 %v547, %v547
        %v550 = vmul.f32 %v549, -0.001358992
        %v551 = vadd.f32 %v550, 0.041655596
        %v552 = vmul.f32 %v549, %v551
        %v553 = vadd.f32 %v552, -0.4999988
        %v554 = vmul.f32 %v549, %v553
        %v555 = vadd.f32 1.0, %v554
        %v556 = vmul.f32 %v547, %v547
        %v557 = vmul.f32 %v556, -0.00019511016
        %v558 = vadd.f32 %v557, 0.008332121
        %v559 = vmul.f32 %v556, %v558
        %v560 = vadd.f32 %v559, -0.16666654
        %v561 = vmul.f32 %v556, %v560
        %v562 = vadd.f32 %v561, 1.0
        %v563 = vmul.f32 %v562, %v547
        %vm564 = vweird.f32 %v264
        %v565 = vadd.s32 %v548, 3
        %v566 = vand.u32 %v565, 3
        %vm567 = vcmp.lt.s32.totalorder %v566, 2
        %vm568 = vcmp.eq.s32.totalorder %v566, 0
        %v569 = vxor.u32 %v563, 2147483648
        %v570 = vsel %vm568, %v555, %v569
        %vm571 = vcmp.eq.s32.totalorder %v566, 2
        %v572 = vxor.u32 %v555, 2147483648
        %v573 = vsel %vm571, %v572, %v563
        %v574 = vsel %vm567, %v570, %v573
        %v575 = vsel %vm564, nan, %v574
        %v576 = vand.u32 2147483647, %v265
        %vm577 = vcmp.le.f32.partialorder %v576, 0.7853982
        %vm578 = vcmp.lt.s32.totalorder %v265, 0
        %v579 = vand.u32 %v265, 2139095040
        %v580 = vshrl.u32 %v579, 23
        %v581 = vsub.s32 %v580, 127
        %v582 = vand.u32 2147483647, %v265
        %v583 = vand.u32 %v582, 8388607
        %v584 = vor.u32 %v583, 8388608
        %v585 = vsub.s32 0, %v584
        %v586 = vadd.s32 %v581, 1
        %vm587 = vcmp.gt.s32.totalorder %v586, 0
        %v588 = vsel %vm587, %v586, 0
        %v589 = vshrl.u32 %v588, 5
        %v590 = vand.u32 %v588, 31
        %v591 = vsub.s32 32, %v590
        %v592 = vshrl.u32 683565275, %v591
        %v593 = vshll.u32 683565275, %v590
        %v594 = vshrl.u32 2475754826, %v591
        %v595 = vor.u32 %v593, %v594
        %v596 = vshll.u32 2475754826, %v590
        %v597 = vshrl.u32 2131351028, %v591
        %v598 = vor.u32 %v596, %v597
        %v599 = vshll.u32 2131351028, %v590
        %v600 = vshrl.u32 2102212464, %v591
        %v601 = vor.u32 %v599, %v600
        %v602 = vshll.u32 2102212464, %v590
        %v603 = vshrl.u32 920167782, %v591
        %v604 = vor.u32 %v602, %v603
        %v605 = vshll.u32 920167782, %v590
        %v606 = vshrl.u32 1326507024, %v591
        %v607 = vor.u32 %v605, %v606
        %vm608 = vcmp.lt.s32.totalorder %v589, 1
        %vm609 = vcmp.lt.s32.totalorder %v589, 2
        %vm610 = vcmp.lt.s32.totalorder %v589, 3
        %vm611 = vcmp.lt.s32.totalorder %v589, 4
        %v612 = vsel %vm608, %v592, %v595
        %v613 = vsel %vm611, %v601, 2102212464
        %v614 = vsel %vm610, %v598, %v613
        %v615 = vsel %vm609, %v612, %v614
        %v616 = vsel %vm608, %v595, %v598
        %v617 = vsel %vm611, %v604, 920167782
        %v618 = vsel %vm610, %v601, %v617
        %v619 = vsel %vm609, %v616, %v618
        %v620 = vsel %vm608, %v598, %v601
        %v621 = vsel %vm611, %v607, 1326507024
        %v622 = vsel %vm610, %v604, %v621
        %v623 = vsel %vm609, %v620, %v622
        %v624 = vshll.u32 %v584, 8
        %v625 = vand.u32 %v624, 65535
        %v626 = vshrl.u32 %v624, 16
        %v627 = vand.u32 %v623, 65535
        %v628 = vshrl.u32 %v623, 16
        %v629 = vmul.u32 %v625, %v627
        %v630 = vmul.u32 %v625, %v628
        %v631 = vmul.u32 %v626, %v627
        %v632 = vmul.u32 %v626, %v628
        %v633 = vshll.u32 %v630, 16
        %v634 = vshrl.u32 %v630, 16
        %v635 = vshll.u32 %v631, 16
        %v636 = vshrl.u32 %v631, 16
        %vm637 = vc.u32 %v629, %v633
        %v638 = vsel %vm637, 1, 0
        %v639 = vadd.s32 %v629, %v633
        %v640 = vadd.s32 %v632, %v638
        %vm641 = vc.u32 %v639, %v635
        %v642 = vsel %vm641, 1, 0
        %v643 = vadd.s32 %v639, %v635
        %v644 = vadd.s32 %v640, %v642
        %v645 = vadd.s32 %v644, %v634
        %v646 = vadd.s32 %v645, %v636
        %v647 = vand.u32 %v624, 65535
        %v648 = vshrl.u32 %v624, 16
        %v649 = vand.u32 %v619, 65535
        %v650 = vshrl.u32 %v619, 16
        %v651 = vmul.u32 %v647, %v649
        %v652 = vmul.u32 %v647, %v650
        %v653 = vmul.u32 %v648, %v649
        %v654 = vmul.u32 %v648, %v650
        %v655 = vshll.u32 %v652, 16
        %v656 = vshrl.u32 %v652, 16
        %v657 = vshll.u32 %v653, 16
        %v658 = vshrl.u32 %v653, 16
        %vm659 = vc.u32 %v651, %v655
        %v660 = vsel %vm659, 1, 0
        %v661 = vadd.s32 %v651, %v655
        %v662 = vadd.s32 %v654, %v660
        %vm663 = vc.u32 %v661, %v657
        %v664 = vsel %vm663, 1, 0
        %v665 = vadd.s32 %v661, %v657
        %v666 = vadd.s32 %v662, %v664
        %v667 = vadd.s32 %v666, %v656
        %v668 = vadd.s32 %v667, %v658
        %v669 = vmul.u32 %v624, %v615
        %v670 = vadd.s32 %v646, %v665
        %vm671 = vc.u32 %v646, %v665
        %v672 = vadd.s32 %v668, 1
        %v673 = vsel %vm671, %v672, %v668
        %v674 = vadd.s32 %v669, %v673
        %v675 = vadd.s32 %v674, 536870912
        %v676 = vshrl.u32 %v675, 30
        %v677 = vshll.u32 %v676, 30
        %v678 = vsub.s32 %v674, %v677
        %vm679 = vcmp.lt.s32.totalorder %v678, 0
        %v680 = vsub.s32 0, %v678
        %v681 = vsel %vm679, %v680, %v678
        %v682 = vclz %v681
        %v683 = vsub.s32 %v682, 2
        %vm684 = vcmp.gt.s32.totalorder 0, %v683
        %v685 = vsel %vm684, 0, %v683
        %v686 = vsub.s32 32, %v685
        %v687 = vshll.u32 %v678, %v685
        %v688 = vshrl.u32 %v670, %v686
        %v689 = vor.u32 %v687, %v688
        %v690 = vsub.s32 4294967266, %v685
        %v691 = vadd.s32 %v690, 127
        %v692 = vshll.u32 %v691, 23
        %v693 = vor.u32 4788187, %v692
        %v694 = vand.u32 2147483647, %v693
        %v696 = vcvt.s32.f32 %v689
        %v697 = vmul.f32 %v696, %v694
        %v698 = vxor.u32 %v697, 2147483648
        %v699 = vsel %vm578, %v698, %v697
        %v700 = vsub.s32 4, %v676
        %v701 = vsel %vm578, %v700, %v676
        %v702 = vsel %vm577, %v265, %v699
        %v703 = vsel %vm577, 0, %v701
        %v704 = vmul.f32 %v702, %v702
        %v705 = vmul.f32 %v704, -0.001358992
        %v706 = vadd.f32 %v705, 0.041655596
        %v707 = vmul.f32 %v704, %v706
        %v708 = vadd.f32 %v707, -0.4999988
        %v709 = vmul.f32 %v704, %v708
        %v710 = vadd.f32 1.0, %v709
        %v711 = vmul.f32 %v702, %v702
        %v712 = vmul.f32 %v711, -0.00019511016
        %v713 = vadd.f32 %v712, 0.008332121
        %v714 = vmul.f32 %v711, %v713
        %v715 = vadd.f32 %v714, -0.16666654
        %v716 = vmul.f32 %v711, %v715
        %v717 = vadd.f32 %v716, 1.0
        %v718 = vmul.f32 %v717, %v702
        %vm719 = vweird.f32 %v265
        %v720 = vadd.s32 %v703, 3
        %v721 = vand.u32 %v720, 3
        %vm722 = vcmp.lt.s32.totalorder %v721, 2
        %vm723 = vcmp.eq.s32.totalorder %v721, 0
        %v724 = vxor.u32 %v718, 2147483648
        %v725 = vsel %vm723, %v710, %v724
        %vm726 = vcmp.eq.s32.totalorder %v721, 2
        %v727 = vxor.u32 %v710, 2147483648
        %v728 = vsel %vm726, %v727, %v718
        %v729 = vsel %vm722, %v725, %v728
        %v730 = vsel %vm719, nan, %v729
        %v731 = vld [vmem:[%s3] sm:$0xff]
        %v732 = vld [vmem:[%s3 + $0x8] sm:$0xff]
        %v733 = vld [vmem:[%s3 + $0x10] sm:$0xff]
        %735 = vset.pattern.permute.xlu0 0
        %736 = vperm.xlu0 %735, %v731
        %v737 = vpop.permute.xlu0 %736
        %740 = vset.pattern.permute.xlu0 0
        %741 = vperm.xlu0 %740, %v732
        %v742 = vpop.permute.xlu0 %741
        %745 = vset.pattern.permute.xlu0 0
        %746 = vperm.xlu0 %745, %v733
        %v747 = vpop.permute.xlu0 %746
        %v749 = vmul.f32 %v420, %v737
        %v750 = vmul.f32 %v575, %v742
        %v751 = vmul.f32 %v730, %v747
        %752 = vst [vmem:[%s188 + $0x3] sm:$0xff] %v749
        %753 = vst [vmem:[%s188 + $0xb] sm:$0xff] %v750
        %754 = vst [vmem:[%s188 + $0x13] sm:$0xff] %v751
        %s755 = sand.u32 %s115, 1
        %s756 = scalar_lea.sflag [#allocation3], %s755
        %s757 = sand.u32 %s115, 1
        %s758 = smul.addr %s757, 32
        %s759 = scalar_lea.vmem [#allocation2], %s758
        // Predicated region
        $region37: #{tpu_custom_call.1} parent=35 // pred_check
          %p760 = pneg %p125
        $region38: #{tpu_custom_call.1} parent=35 // pred_check_branch
          %762 = sbr.rel (%p760) target = $region40
        $region39: #{tpu_custom_call.1} parent=35 // pred_region
          %764 = vsyncadd %s756, 0
          %s765 = smul.addr %s18, 8
          %s766 = scalar_lea.hbm %s4, %s765
          %s767 = sshll.u32 %s759, 4
          %s768 = int_to_ptr.vmem [resolvable:$true] %s767
          %s769 = sshll.u32 %s766, 4
          %s770 = int_to_ptr.hbm [resolvable:$true] %s769
          %775 = dma.vmem_to_hbm [thread:$0]  %s768, 512, %s770, %s756, 128, 256, 8
        $region40: #{tpu_custom_call.1} parent=35 // pred_fallthru
          _
      $region36: #{tpu_custom_call.1} parent=5 // pred_fallthru
        _
      %p776 = scmp.le.s32.totalorder 2, %s13
      // Predicated region
      $region41: #{tpu_custom_call.1} parent=5 // pred_check
        %p777 = pneg %p776
      $region42: #{tpu_custom_call.1} parent=5 // pred_check_branch
        %779 = sbr.rel (%p777) target = $region44
      $region43: #{tpu_custom_call.1} parent=5 // pred_region
        %s780 = ssub.s32 %s13, 2
        // Predicated region
        $region45: #{tpu_custom_call.1} parent=43 // pred_check
          %p781 = pneg %p131
        $region46: #{tpu_custom_call.1} parent=43 // pred_check_branch
          %783 = sbr.rel (%p781) target = $region48
        $region47: #{tpu_custom_call.1} parent=43 // pred_region
          %s784 = sand.u32 %s116, 1
          %s785 = scalar_lea.sflag [#allocation3], %s784
          %s786 = sand.u32 %s116, 1
          %s787 = smul.addr %s786, 32
          %s788 = scalar_lea.vmem [#allocation2], %s787
          %790 = dma.done %s785, 512
        $region48: #{tpu_custom_call.1} parent=43 // pred_fallthru
          _
      $region44: #{tpu_custom_call.1} parent=5 // pred_fallthru
        _
    $region6: #{tpu_custom_call.1} parent=1 // loop_footer
      %s17 = sadd.s32 1, %s13
    $region7: #{tpu_custom_call.1} parent=1 // loop_footer_branch
      %12 = sbr.rel target = $region3
    $region8: #{tpu_custom_call.1} parent=1 // loop_exit
      _
    %791 = vsyncpa [#allocation3], 1
    %s792 = scalar_lea.sflag [#allocation3], 1
    %793 = vsyncpa %s792, 1

</llo_original>
